<compile_context>
chip_gen: v6e
topology: v6e:2x2x1
jax: 0.10.0
libtpu: 0.0.40
codegen_flags: <defaults>
</compile_context>

<pallas_src>
import functools

import jax
import jax.numpy as jnp
from jax import lax
from jax.experimental import pallas as pl
from jax.experimental.pallas import tpu as pltpu

_LANE = 128
# ~4 MiB of bytes per block: near the HBM roofline on all chips, and
# (in + out) x double-buffering = 16 MiB of pipeline buffers.
_TARGET_BLOCK_BYTES = 4 * 1024 * 1024
_VMEM_LIMIT_BYTES = 48 * 1024 * 1024  # safe on v5e/v6e (128 MiB) and v7x (64 MiB)

# splitmix32-style constants (fallback hash path only).
_GOLDEN = 0x9E3779B9
_MIX1 = 0x7FEB352D
_MIX2 = 0x846CA68B


def _noise_kernel_hw(sigma, seed_ref, x_ref, o_ref):
    """Hardware-PRNG path (real TPUs). One PRNG draw per vreg -> HBM bound."""
    pltpu.prng_seed(seed_ref[0] + pl.program_id(0))
    bits = pltpu.prng_random_bits(x_ref.shape)
    # Low 24 bits -> u01 in [0, 1); dtype-agnostic (works for int32 or uint32 bits).
    u01 = (bits & 0xFFFFFF).astype(jnp.float32) * jnp.float32(1.0 / (1 << 24))
    # factor = (1 - sigma) + u01 * (2 * sigma)  (single FMA)
    factor = u01 * jnp.float32(2.0 * sigma) + jnp.float32(1.0 - sigma)
    o_ref[...] = x_ref[...] * factor.astype(o_ref.dtype)


def _noise_kernel_hash(sigma, seed_ref, x_ref, o_ref):
    """Portable counter-hash fallback (interpret mode / non-TPU backends)."""
    br, w = x_ref.shape
    # Fold seed into the scalar base once (scalar-unit work, free).
    base = (pl.program_id(0).astype(jnp.uint32) * jnp.uint32(br * w)
            + seed_ref[0].astype(jnp.uint32) * jnp.uint32(_GOLDEN))
    rows = lax.broadcasted_iota(jnp.int32, (br, w), 0).astype(jnp.uint32)
    cols = lax.broadcasted_iota(jnp.int32, (br, w), 1).astype(jnp.uint32)
    h = base + rows * jnp.uint32(w) + cols
    # splitmix32-style avalanche -> uniform 32-bit words.
    h = h ^ (h >> jnp.uint32(16))
    h = h * jnp.uint32(_MIX1)
    h = h ^ (h >> jnp.uint32(15))
    h = h * jnp.uint32(_MIX2)
    h = h ^ (h >> jnp.uint32(16))
    u01 = (h >> jnp.uint32(8)).astype(jnp.float32) * jnp.float32(1.0 / (1 << 24))
    factor = u01 * jnp.float32(2.0 * sigma) + jnp.float32(1.0 - sigma)
    o_ref[...] = x_ref[...] * factor.astype(o_ref.dtype)


def _slab_layout(n):
    """(rows, width) lane-dense 2D view; n must be a multiple of 128."""
    for w in (8192, 4096, 2048, 1024, 512, 256, 128):
        if n % w == 0:
            return n // w, w
    raise ValueError("internal: n must be a multiple of 128")


def _block_rows(rows, w, itemsize):
    """Block rows: ~_TARGET_BLOCK_BYTES per block, >=4 grid steps if multi-block."""
    target = max(1, (_TARGET_BLOCK_BYTES // itemsize) // w)
    if target >= rows:
        return rows                       # full dim -> always legal
    # Cap so the 'parallel' axis has >= 4 steps (v7x megacore split).
    target = min(target, max(1, pl.cdiv(rows, 4)))
    br = max(32, (target // 32) * 32)     # multiple of 32: safe for f32/bf16/i8
    return min(br, rows)


def weight_multiplicative_uniform_noise(
    x,
    seed,
    sigma: float,
    *,
    enabled: bool = True,
    training: bool = True,
    use_hw_prng=None,
):
    """Pallas equivalent of WeightMultiplicativeUniformNoiseLayer.forward."""
    assert sigma >= 0.0, f"sigma must be non-negative, but got {sigma}"
    if x is None or not (enabled and training):
        return x

    orig_shape = x.shape
    n = x.size
    if n == 0:
        return x

    if use_hw_prng is None:
        use_hw_prng = jax.default_backend() == "tpu"

    if isinstance(seed, int):
        seed = seed & 0x7FFFFFFF
    seed_arr = jnp.asarray(seed, dtype=jnp.int32).reshape(1)

    flat = x.reshape(-1)
    n_tail = n % _LANE
    n_main = n - n_tail

    main_out = None
    if n_main:
        main = flat[:n_main] if n_tail else flat
        rows, w = _slab_layout(n_main)
        x2d = main.reshape(rows, w)
        br = _block_rows(rows, w, x.dtype.itemsize)
        grid = (pl.cdiv(rows, br),)

        kernel_body = _noise_kernel_hw if use_hw_prng else _noise_kernel_hash
        kernel = functools.partial(kernel_body, float(sigma))

        out2d = pl.pallas_call(
            kernel,
            out_shape=jax.ShapeDtypeStruct((rows, w), x.dtype),
            grid_spec=pltpu.PrefetchScalarGridSpec(
                num_scalar_prefetch=1,
                grid=grid,
                in_specs=[pl.BlockSpec((br, w), lambda i, seed_ref: (i, 0))],
                out_specs=pl.BlockSpec((br, w), lambda i, seed_ref: (i, 0)),
            ),
            compiler_params=pltpu.CompilerParams(
                dimension_semantics=("parallel",),  # noise keyed on block id, not order
                vmem_limit_bytes=_VMEM_LIMIT_BYTES,
            ),
        )(seed_arr, x2d)
        main_out = out2d.reshape(-1)

    if n_tail:
        # Tiny unaligned tail (< 128 elems): plain jnp, negligible cost, and it
        # avoids a full extra HBM pad + slice pass over the whole tensor.
        tail = flat[n_main:]
        key = jax.random.PRNGKey(seed_arr[0])
        u = jax.random.uniform(key, (n_tail,), dtype=jnp.float32,
                               minval=-float(sigma), maxval=float(sigma))
        tail_out = (tail.astype(jnp.float32) * (1.0 + u)).astype(x.dtype)
        if main_out is None:
            return tail_out.reshape(orig_shape)
        return jnp.concatenate([main_out, tail_out]).reshape(orig_shape)

    return main_out.reshape(orig_shape)


if __name__ == "__main__":
    key = jax.random.PRNGKey(0)
    sigma = 0.1

    # NCHW input matching the PyTorch convention (elementwise op).
    x = jax.random.normal(key, (2, 4, 16, 16), dtype=jnp.float32)

    # Enabled + training: multiplicative uniform noise.
    y = weight_multiplicative_uniform_noise(x, seed=1234, sigma=sigma,
                                            enabled=True, training=True)
    y = jax.block_until_ready(y)

    # Disabled: identity.
    y_id = weight_multiplicative_uniform_noise(x, seed=1234, sigma=sigma,
                                               enabled=False, training=True)
    y_id = jax.block_until_ready(y_id)

    assert y.shape == x.shape and y.dtype == x.dtype
    ratio = jnp.where(x != 0, y / x, 1.0)
    assert bool(jnp.all(ratio >= 1.0 - sigma - 1e-5))
    assert bool(jnp.all(ratio <= 1.0 + sigma + 1e-5))
    assert bool(jnp.all(y_id == x))

    # bf16 input: same-byte-size blocks, native-dtype multiply.
    xb = jax.random.normal(jax.random.PRNGKey(2), (4, 256), dtype=jnp.bfloat16)
    yb = jax.block_until_ready(
        weight_multiplicative_uniform_noise(xb, seed=55, sigma=sigma))
    assert yb.shape == xb.shape and yb.dtype == xb.dtype
    rb = jnp.where(xb.astype(jnp.float32) != 0,
                   yb.astype(jnp.float32) / xb.astype(jnp.float32), 1.0)
    assert bool(jnp.all(rb >= 1.0 - sigma - 1e-2))
    assert bool(jnp.all(rb <= 1.0 + sigma + 1e-2))

    # Ragged size smaller than one lane: pure jnp tail path.
    x3 = jax.random.normal(jax.random.PRNGKey(1), (3, 5, 7), dtype=jnp.float32)
    y3 = jax.block_until_ready(
        weight_multiplicative_uniform_noise(x3, seed=7, sigma=sigma))
    assert y3.shape == x3.shape and y3.dtype == x3.dtype
    r3 = jnp.where(x3 != 0, y3 / x3, 1.0)
    assert bool(jnp.all(r3 >= 1.0 - sigma - 1e-5))
    assert bool(jnp.all(r3 <= 1.0 + sigma + 1e-5))

    # Ragged size with an aligned prefix: kernel prefix + jnp tail.
    x4 = jax.random.normal(jax.random.PRNGKey(3), (1, 200), dtype=jnp.float32)
    y4 = jax.block_until_ready(
        weight_multiplicative_uniform_noise(x4, seed=9, sigma=sigma))
    assert y4.shape == x4.shape and y4.dtype == x4.dtype
    r4 = jnp.where(x4 != 0, y4 / x4, 1.0)
    assert bool(jnp.all(r4 >= 1.0 - sigma - 1e-5))
    assert bool(jnp.all(r4 <= 1.0 + sigma + 1e-5))

    print("KERNEL_OK")
</pallas_src>

<mosaic_0001>
module attributes {stable_mosaic.version = 11 : i64} {
  func.func @_noise_kernel_hash(%arg0: i32, %arg1: memref<1xi32, #tpu.memory_space<smem>>, %arg2: memref<1x2048xf32, #tpu.memory_space<vmem>>, %arg3: memref<1x2048xf32, #tpu.memory_space<vmem>>) attributes {dimension_semantics = [#tpu.dimension_semantics<parallel>], iteration_bounds = array<i64: 1>, scalar_prefetch = 1 : i64, scratch_operands = 0 : i64, tpu.core_type = #tpu.core_type<tc>, window_params = [{transform_indices = @transform_0, window_bounds = array<i64: 1, 2048>}, {transform_indices = @transform_1, window_bounds = array<i64: 1, 2048>}]} {
    %c2048_i32 = arith.constant 2048 : i32
    %0 = arith.muli %arg0, %c2048_i32 : i32
    %c0 = arith.constant 0 : index
    %1 = memref.load %arg1[%c0] : memref<1xi32, #tpu.memory_space<smem>>
    %c-1640531527_i32 = arith.constant -1640531527 : i32
    %2 = arith.muli %1, %c-1640531527_i32 : i32
    %3 = arith.addi %0, %2 : i32
    %4 = tpu.iota {dimensions = array<i32: 0>} : vector<1x2048xi32>
    %5 = tpu.iota {dimensions = array<i32: 1>} : vector<1x2048xi32>
    %c2048_i32_0 = arith.constant 2048 : i32
    %6 = vector.broadcast %c2048_i32_0 : i32 to vector<1x2048xi32>
    %7 = arith.muli %4, %6 : vector<1x2048xi32>
    %8 = vector.broadcast %3 : i32 to vector<1x2048xi32>
    %9 = arith.addi %8, %7 : vector<1x2048xi32>
    %10 = arith.addi %9, %5 : vector<1x2048xi32>
    %c16_i32 = arith.constant 16 : i32
    %11 = vector.broadcast %c16_i32 : i32 to vector<1x2048xi32>
    %12 = arith.shrui %10, %11 : vector<1x2048xi32>
    %13 = arith.xori %10, %12 : vector<1x2048xi32>
    %c2146121005_i32 = arith.constant 2146121005 : i32
    %14 = vector.broadcast %c2146121005_i32 : i32 to vector<1x2048xi32>
    %15 = arith.muli %13, %14 : vector<1x2048xi32>
    %c15_i32 = arith.constant 15 : i32
    %16 = vector.broadcast %c15_i32 : i32 to vector<1x2048xi32>
    %17 = arith.shrui %15, %16 : vector<1x2048xi32>
    %18 = arith.xori %15, %17 : vector<1x2048xi32>
    %c-2073254261_i32 = arith.constant -2073254261 : i32
    %19 = vector.broadcast %c-2073254261_i32 : i32 to vector<1x2048xi32>
    %20 = arith.muli %18, %19 : vector<1x2048xi32>
    %c16_i32_1 = arith.constant 16 : i32
    %21 = vector.broadcast %c16_i32_1 : i32 to vector<1x2048xi32>
    %22 = arith.shrui %20, %21 : vector<1x2048xi32>
    %23 = arith.xori %20, %22 : vector<1x2048xi32>
    %c8_i32 = arith.constant 8 : i32
    %24 = vector.broadcast %c8_i32 : i32 to vector<1x2048xi32>
    %25 = arith.shrui %23, %24 : vector<1x2048xi32>
    %26 = arith.uitofp %25 : vector<1x2048xi32> to vector<1x2048xf32>
    %cst = arith.constant 5.96046448E-8 : f32
    %27 = vector.broadcast %cst : f32 to vector<1x2048xf32>
    %28 = arith.mulf %26, %27 : vector<1x2048xf32>
    %cst_2 = arith.constant 2.000000e-01 : f32
    %29 = vector.broadcast %cst_2 : f32 to vector<1x2048xf32>
    %30 = arith.mulf %28, %29 : vector<1x2048xf32>
    %cst_3 = arith.constant 0.899999976 : f32
    %31 = vector.broadcast %cst_3 : f32 to vector<1x2048xf32>
    %32 = arith.addf %30, %31 : vector<1x2048xf32>
    %c0_4 = arith.constant 0 : index
    %c0_5 = arith.constant 0 : index
    %33 = vector.load %arg2[%c0_4, %c0_5] : memref<1x2048xf32, #tpu.memory_space<vmem>>, vector<1x2048xf32>
    %34 = arith.mulf %33, %32 : vector<1x2048xf32>
    %c0_6 = arith.constant 0 : index
    %c0_7 = arith.constant 0 : index
    %35 = vector.load %arg3[%c0_6, %c0_7] : memref<1x2048xf32, #tpu.memory_space<vmem>>, vector<1x2048xf32>
    tpu.vector_store %arg3[%c0_6, %c0_7], %34 {strides = array<i32>} : memref<1x2048xf32, #tpu.memory_space<vmem>>, vector<1x2048xf32>,
    return
  }
  func.func @transform_0(%arg0: i32, %arg1: memref<1xi32, #tpu.memory_space<smem>>) -> (i32, i32) {
    %c0_i32 = arith.constant 0 : i32
    %c0_i32_0 = arith.constant 0 : i32
    return %arg0, %c0_i32 : i32, i32
  }
  func.func @transform_1(%arg0: i32, %arg1: memref<1xi32, #tpu.memory_space<smem>>) -> (i32, i32) {
    %c0_i32 = arith.constant 0 : i32
    %c0_i32_0 = arith.constant 0 : i32
    return %arg0, %c0_i32 : i32, i32
  }
}

</mosaic_0001>

<llo_original>
// kernel: tpu_custom_call.1
$region0: #{tpu_custom_call.1}
  #allocation0 [shape = 'u32[]', space=smem, size = 0x4, offset = 0x4, fixed_abs, tag = 'smem constant byte address 0x4 - core index']
  #allocation1 [shape = 'u32[144,128]{1,0:T(1,128)}', space=vmem, size = 0x12000, scoped, tag = 'internal scratch']
  #allocation2 [shape = 's32[1]{0}', space=sflag, size = 0x4, scoped, tag = 'scoped memory for tpu_custom_call.1']
  #allocation3 [shape = 's32[1]{0:T(128)S(6)}', space=smem, size = 0x200, scoped, tag = 'prefetched SMEM operand 0']
  %s0 = inlined_call_operand.<no memory space> [shape: s32[1], index: 0, kind: input, shape index: {}]
  %s1 = inlined_call_operand.hbm [shape: f32[1,2048], index: 1, kind: input, shape index: {}]
  %s2 = inlined_call_operand.hbm [shape: f32[1,2048], index: 2, kind: output, shape index: {}]
  %s3 = sld [smem:[#allocation0]]
  $region18: #{tpu_custom_call.1} parent=0
    _
  %s5 = ssub.s32 1, %s3
  %s6 = scalar_select 0, %s5, %s3
  %7 = sst [smem:[#allocation3]] %s0
  $region1: #{tpu_custom_call.1} parent=0
    #allocation4 [shape = 'u8[8192]{0}', space=vmem, size = 0x2000, scoped, tag = 'input window, operand 1, single buffered']
    #allocation5 [shape = 's32[1]{0}', space=sflag, size = 0x4, scoped, tag = 'scoped memory for tpu_custom_call.1']
    #allocation6 [shape = 's32[1]{0}', space=sflag, size = 0x4, scoped, tag = 'scoped memory for tpu_custom_call.1']
    #allocation7 [shape = 'u8[8192]{0}', space=vmem, size = 0x2000, scoped, tag = 'output window, operand 0, single buffered']
    %8 = vsyncpa [#allocation5], 0
    %9 = vsyncpa [#allocation6], 0
    // Predicated region
    $region2: #{tpu_custom_call.1} parent=1 // pred_check
      _
    $region3: #{tpu_custom_call.1} parent=1 // pred_check_branch
      %11 = sbr.rel (0) target = $region5
    $region4: #{tpu_custom_call.1} parent=1 // pred_region
      %s13 = ssub.s32 256, 256
      %14 = vsyncadd [#allocation5], %s13
      %s16 = sshll.u32 [#allocation4], 4
      %s17 = int_to_ptr.vmem [resolvable:$true] %s16
      %19 = dma.hbm_to_vmem [thread:$0]  %s1, 256, %s17, [#allocation5]
    $region5: #{tpu_custom_call.1} parent=1 // pred_fallthru
      _
    // Predicated region
    $region6: #{tpu_custom_call.1} parent=1 // pred_check
      _
    $region7: #{tpu_custom_call.1} parent=1 // pred_check_branch
      %21 = sbr.rel (0) target = $region9
    $region8: #{tpu_custom_call.1} parent=1 // pred_region
      %22 = dma.done [#allocation5], 256
    $region9: #{tpu_custom_call.1} parent=1 // pred_fallthru
      _
    %s23 = smul.u32 0, 2048
    %s24 = sld [smem:[#allocation3]]
    %s25 = smul.u32 %s24, 2654435769
    %s26 = sadd.s32 %s23, %s25
    %v27 = vlaneseq
    %v28 = vshrl.u32 %v27, 7
    %v29 = vlaneseq
    %v30 = vand.u32 %v29, 127
    %v31 = vadd.s32 %v30, 128
    %v32 = vadd.s32 %v30, 256
    %v33 = vadd.s32 %v30, 384
    %v34 = vadd.s32 %v30, 512
    %v35 = vadd.s32 %v30, 640
    %v36 = vadd.s32 %v30, 768
    %v37 = vadd.s32 %v30, 896
    %v38 = vadd.s32 %v30, 1024
    %v39 = vadd.s32 %v30, 1152
    %v40 = vadd.s32 %v30, 1280
    %v41 = vadd.s32 %v30, 1408
    %v42 = vadd.s32 %v30, 1536
    %v43 = vadd.s32 %v30, 1664
    %v44 = vadd.s32 %v30, 1792
    %v45 = vadd.s32 %v30, 1920
    %v46 = vmul.u32 %v28, 2048
    %v47 = vstv %s26
    %v48 = vadd.s32 %v47, %v46
    %v49 = vadd.s32 %v48, %v30
    %v50 = vadd.s32 %v48, %v31
    %v51 = vadd.s32 %v48, %v32
    %v52 = vadd.s32 %v48, %v33
    %v53 = vadd.s32 %v48, %v34
    %v54 = vadd.s32 %v48, %v35
    %v55 = vadd.s32 %v48, %v36
    %v56 = vadd.s32 %v48, %v37
    %v57 = vadd.s32 %v48, %v38
    %v58 = vadd.s32 %v48, %v39
    %v59 = vadd.s32 %v48, %v40
    %v60 = vadd.s32 %v48, %v41
    %v61 = vadd.s32 %v48, %v42
    %v62 = vadd.s32 %v48, %v43
    %v63 = vadd.s32 %v48, %v44
    %v64 = vadd.s32 %v48, %v45
    %v65 = vshrl.u32 %v49, 16
    %v66 = vshrl.u32 %v50, 16
    %v67 = vshrl.u32 %v51, 16
    %v68 = vshrl.u32 %v52, 16
    %v69 = vshrl.u32 %v53, 16
    %v70 = vshrl.u32 %v54, 16
    %v71 = vshrl.u32 %v55, 16
    %v72 = vshrl.u32 %v56, 16
    %v73 = vshrl.u32 %v57, 16
    %v74 = vshrl.u32 %v58, 16
    %v75 = vshrl.u32 %v59, 16
    %v76 = vshrl.u32 %v60, 16
    %v77 = vshrl.u32 %v61, 16
    %v78 = vshrl.u32 %v62, 16
    %v79 = vshrl.u32 %v63, 16
    %v80 = vshrl.u32 %v64, 16
    %v81 = vxor.u32 %v49, %v65
    %v82 = vxor.u32 %v50, %v66
    %v83 = vxor.u32 %v51, %v67
    %v84 = vxor.u32 %v52, %v68
    %v85 = vxor.u32 %v53, %v69
    %v86 = vxor.u32 %v54, %v70
    %v87 = vxor.u32 %v55, %v71
    %v88 = vxor.u32 %v56, %v72
    %v89 = vxor.u32 %v57, %v73
    %v90 = vxor.u32 %v58, %v74
    %v91 = vxor.u32 %v59, %v75
    %v92 = vxor.u32 %v60, %v76
    %v93 = vxor.u32 %v61, %v77
    %v94 = vxor.u32 %v62, %v78
    %v95 = vxor.u32 %v63, %v79
    %v96 = vxor.u32 %v64, %v80
    %v97 = vmul.u32 %v81, 2146121005
    %v98 = vmul.u32 %v82, 2146121005
    %v99 = vmul.u32 %v83, 2146121005
    %v100 = vmul.u32 %v84, 2146121005
    %v101 = vmul.u32 %v85, 2146121005
    %v102 = vmul.u32 %v86, 2146121005
    %v103 = vmul.u32 %v87, 2146121005
    %v104 = vmul.u32 %v88, 2146121005
    %v105 = vmul.u32 %v89, 2146121005
    %v106 = vmul.u32 %v90, 2146121005
    %v107 = vmul.u32 %v91, 2146121005
    %v108 = vmul.u32 %v92, 2146121005
    %v109 = vmul.u32 %v93, 2146121005
    %v110 = vmul.u32 %v94, 2146121005
    %v111 = vmul.u32 %v95, 2146121005
    %v112 = vmul.u32 %v96, 2146121005
    %v113 = vshrl.u32 %v97, 15
    %v114 = vshrl.u32 %v98, 15
    %v115 = vshrl.u32 %v99, 15
    %v116 = vshrl.u32 %v100, 15
    %v117 = vshrl.u32 %v101, 15
    %v118 = vshrl.u32 %v102, 15
    %v119 = vshrl.u32 %v103, 15
    %v120 = vshrl.u32 %v104, 15
    %v121 = vshrl.u32 %v105, 15
    %v122 = vshrl.u32 %v106, 15
    %v123 = vshrl.u32 %v107, 15
    %v124 = vshrl.u32 %v108, 15
    %v125 = vshrl.u32 %v109, 15
    %v126 = vshrl.u32 %v110, 15
    %v127 = vshrl.u32 %v111, 15
    %v128 = vshrl.u32 %v112, 15
    %v129 = vxor.u32 %v97, %v113
    %v130 = vxor.u32 %v98, %v114
    %v131 = vxor.u32 %v99, %v115
    %v132 = vxor.u32 %v100, %v116
    %v133 = vxor.u32 %v101, %v117
    %v134 = vxor.u32 %v102, %v118
    %v135 = vxor.u32 %v103, %v119
    %v136 = vxor.u32 %v104, %v120
    %v137 = vxor.u32 %v105, %v121
    %v138 = vxor.u32 %v106, %v122
    %v139 = vxor.u32 %v107, %v123
    %v140 = vxor.u32 %v108, %v124
    %v141 = vxor.u32 %v109, %v125
    %v142 = vxor.u32 %v110, %v126
    %v143 = vxor.u32 %v111, %v127
    %v144 = vxor.u32 %v112, %v128
    %v145 = vmul.u32 %v129, 2221713035
    %v146 = vmul.u32 %v130, 2221713035
    %v147 = vmul.u32 %v131, 2221713035
    %v148 = vmul.u32 %v132, 2221713035
    %v149 = vmul.u32 %v133, 2221713035
    %v150 = vmul.u32 %v134, 2221713035
    %v151 = vmul.u32 %v135, 2221713035
    %v152 = vmul.u32 %v136, 2221713035
    %v153 = vmul.u32 %v137, 2221713035
    %v154 = vmul.u32 %v138, 2221713035
    %v155 = vmul.u32 %v139, 2221713035
    %v156 = vmul.u32 %v140, 2221713035
    %v157 = vmul.u32 %v141, 2221713035
    %v158 = vmul.u32 %v142, 2221713035
    %v159 = vmul.u32 %v143, 2221713035
    %v160 = vmul.u32 %v144, 2221713035
    %v161 = vshrl.u32 %v145, 16
    %v162 = vshrl.u32 %v146, 16
    %v163 = vshrl.u32 %v147, 16
    %v164 = vshrl.u32 %v148, 16
    %v165 = vshrl.u32 %v149, 16
    %v166 = vshrl.u32 %v150, 16
    %v167 = vshrl.u32 %v151, 16
    %v168 = vshrl.u32 %v152, 16
    %v169 = vshrl.u32 %v153, 16
    %v170 = vshrl.u32 %v154, 16
    %v171 = vshrl.u32 %v155, 16
    %v172 = vshrl.u32 %v156, 16
    %v173 = vshrl.u32 %v157, 16
    %v174 = vshrl.u32 %v158, 16
    %v175 = vshrl.u32 %v159, 16
    %v176 = vshrl.u32 %v160, 16
    %v177 = vxor.u32 %v145, %v161
    %v178 = vxor.u32 %v146, %v162
    %v179 = vxor.u32 %v147, %v163
    %v180 = vxor.u32 %v148, %v164
    %v181 = vxor.u32 %v149, %v165
    %v182 = vxor.u32 %v150, %v166
    %v183 = vxor.u32 %v151, %v167
    %v184 = vxor.u32 %v152, %v168
    %v185 = vxor.u32 %v153, %v169
    %v186 = vxor.u32 %v154, %v170
    %v187 = vxor.u32 %v155, %v171
    %v188 = vxor.u32 %v156, %v172
    %v189 = vxor.u32 %v157, %v173
    %v190 = vxor.u32 %v158, %v174
    %v191 = vxor.u32 %v159, %v175
    %v192 = vxor.u32 %v160, %v176
    %v193 = vshrl.u32 %v177, 8
    %v194 = vshrl.u32 %v178, 8
    %v195 = vshrl.u32 %v179, 8
    %v196 = vshrl.u32 %v180, 8
    %v197 = vshrl.u32 %v181, 8
    %v198 = vshrl.u32 %v182, 8
    %v199 = vshrl.u32 %v183, 8
    %v200 = vshrl.u32 %v184, 8
    %v201 = vshrl.u32 %v185, 8
    %v202 = vshrl.u32 %v186, 8
    %v203 = vshrl.u32 %v187, 8
    %v204 = vshrl.u32 %v188, 8
    %v205 = vshrl.u32 %v189, 8
    %v206 = vshrl.u32 %v190, 8
    %v207 = vshrl.u32 %v191, 8
    %v208 = vshrl.u32 %v192, 8
    %v209 = vshrl.u32 %v193, 16
    %v210 = vand.u32 %v193, 65535
    %v211 = vcvt.s32.f32 %v209
    %v212 = vmul.f32 %v211, 65536.0
    %v213 = vcvt.s32.f32 %v210
    %v214 = vadd.f32 %v212, %v213
    %v215 = vshrl.u32 %v194, 16
    %v216 = vand.u32 %v194, 65535
    %v217 = vcvt.s32.f32 %v215
    %v218 = vmul.f32 %v217, 65536.0
    %v219 = vcvt.s32.f32 %v216
    %v220 = vadd.f32 %v218, %v219
    %v221 = vshrl.u32 %v195, 16
    %v222 = vand.u32 %v195, 65535
    %v223 = vcvt.s32.f32 %v221
    %v224 = vmul.f32 %v223, 65536.0
    %v225 = vcvt.s32.f32 %v222
    %v226 = vadd.f32 %v224, %v225
    %v227 = vshrl.u32 %v196, 16
    %v228 = vand.u32 %v196, 65535
    %v229 = vcvt.s32.f32 %v227
    %v230 = vmul.f32 %v229, 65536.0
    %v231 = vcvt.s32.f32 %v228
    %v232 = vadd.f32 %v230, %v231
    %v233 = vshrl.u32 %v197, 16
    %v234 = vand.u32 %v197, 65535
    %v235 = vcvt.s32.f32 %v233
    %v236 = vmul.f32 %v235, 65536.0
    %v237 = vcvt.s32.f32 %v234
    %v238 = vadd.f32 %v236, %v237
    %v239 = vshrl.u32 %v198, 16
    %v240 = vand.u32 %v198, 65535
    %v241 = vcvt.s32.f32 %v239
    %v242 = vmul.f32 %v241, 65536.0
    %v243 = vcvt.s32.f32 %v240
    %v244 = vadd.f32 %v242, %v243
    %v245 = vshrl.u32 %v199, 16
    %v246 = vand.u32 %v199, 65535
    %v247 = vcvt.s32.f32 %v245
    %v248 = vmul.f32 %v247, 65536.0
    %v249 = vcvt.s32.f32 %v246
    %v250 = vadd.f32 %v248, %v249
    %v251 = vshrl.u32 %v200, 16
    %v252 = vand.u32 %v200, 65535
    %v253 = vcvt.s32.f32 %v251
    %v254 = vmul.f32 %v253, 65536.0
    %v255 = vcvt.s32.f32 %v252
    %v256 = vadd.f32 %v254, %v255
    %v257 = vshrl.u32 %v201, 16
    %v258 = vand.u32 %v201, 65535
    %v259 = vcvt.s32.f32 %v257
    %v260 = vmul.f32 %v259, 65536.0
    %v261 = vcvt.s32.f32 %v258
    %v262 = vadd.f32 %v260, %v261
    %v263 = vshrl.u32 %v202, 16
    %v264 = vand.u32 %v202, 65535
    %v265 = vcvt.s32.f32 %v263
    %v266 = vmul.f32 %v265, 65536.0
    %v267 = vcvt.s32.f32 %v264
    %v268 = vadd.f32 %v266, %v267
    %v269 = vshrl.u32 %v203, 16
    %v270 = vand.u32 %v203, 65535
    %v271 = vcvt.s32.f32 %v269
    %v272 = vmul.f32 %v271, 65536.0
    %v273 = vcvt.s32.f32 %v270
    %v274 = vadd.f32 %v272, %v273
    %v275 = vshrl.u32 %v204, 16
    %v276 = vand.u32 %v204, 65535
    %v277 = vcvt.s32.f32 %v275
    %v278 = vmul.f32 %v277, 65536.0
    %v279 = vcvt.s32.f32 %v276
    %v280 = vadd.f32 %v278, %v279
    %v281 = vshrl.u32 %v205, 16
    %v282 = vand.u32 %v205, 65535
    %v283 = vcvt.s32.f32 %v281
    %v284 = vmul.f32 %v283, 65536.0
    %v285 = vcvt.s32.f32 %v282
    %v286 = vadd.f32 %v284, %v285
    %v287 = vshrl.u32 %v206, 16
    %v288 = vand.u32 %v206, 65535
    %v289 = vcvt.s32.f32 %v287
    %v290 = vmul.f32 %v289, 65536.0
    %v291 = vcvt.s32.f32 %v288
    %v292 = vadd.f32 %v290, %v291
    %v293 = vshrl.u32 %v207, 16
    %v294 = vand.u32 %v207, 65535
    %v295 = vcvt.s32.f32 %v293
    %v296 = vmul.f32 %v295, 65536.0
    %v297 = vcvt.s32.f32 %v294
    %v298 = vadd.f32 %v296, %v297
    %v299 = vshrl.u32 %v208, 16
    %v300 = vand.u32 %v208, 65535
    %v301 = vcvt.s32.f32 %v299
    %v302 = vmul.f32 %v301, 65536.0
    %v303 = vcvt.s32.f32 %v300
    %v304 = vadd.f32 %v302, %v303
    %v305 = vmul.f32 %v214, 5.9604645e-08
    %v306 = vmul.f32 %v220, 5.9604645e-08
    %v307 = vmul.f32 %v226, 5.9604645e-08
    %v308 = vmul.f32 %v232, 5.9604645e-08
    %v309 = vmul.f32 %v238, 5.9604645e-08
    %v310 = vmul.f32 %v244, 5.9604645e-08
    %v311 = vmul.f32 %v250, 5.9604645e-08
    %v312 = vmul.f32 %v256, 5.9604645e-08
    %v313 = vmul.f32 %v262, 5.9604645e-08
    %v314 = vmul.f32 %v268, 5.9604645e-08
    %v315 = vmul.f32 %v274, 5.9604645e-08
    %v316 = vmul.f32 %v280, 5.9604645e-08
    %v317 = vmul.f32 %v286, 5.9604645e-08
    %v318 = vmul.f32 %v292, 5.9604645e-08
    %v319 = vmul.f32 %v298, 5.9604645e-08
    %v320 = vmul.f32 %v304, 5.9604645e-08
    %v321 = vmul.f32 %v305, 0.2
    %v322 = vmul.f32 %v306, 0.2
    %v323 = vmul.f32 %v307, 0.2
    %v324 = vmul.f32 %v308, 0.2
    %v325 = vmul.f32 %v309, 0.2
    %v326 = vmul.f32 %v310, 0.2
    %v327 = vmul.f32 %v311, 0.2
    %v328 = vmul.f32 %v312, 0.2
    %v329 = vmul.f32 %v313, 0.2
    %v330 = vmul.f32 %v314, 0.2
    %v331 = vmul.f32 %v315, 0.2
    %v332 = vmul.f32 %v316, 0.2
    %v333 = vmul.f32 %v317, 0.2
    %v334 = vmul.f32 %v318, 0.2
    %v335 = vmul.f32 %v319, 0.2
    %v336 = vmul.f32 %v320, 0.2
    %v337 = vadd.f32 %v321, 0.9
    %v338 = vadd.f32 %v322, 0.9
    %v339 = vadd.f32 %v323, 0.9
    %v340 = vadd.f32 %v324, 0.9
    %v341 = vadd.f32 %v325, 0.9
    %v342 = vadd.f32 %v326, 0.9
    %v343 = vadd.f32 %v327, 0.9
    %v344 = vadd.f32 %v328, 0.9
    %v345 = vadd.f32 %v329, 0.9
    %v346 = vadd.f32 %v330, 0.9
    %v347 = vadd.f32 %v331, 0.9
    %v348 = vadd.f32 %v332, 0.9
    %v349 = vadd.f32 %v333, 0.9
    %v350 = vadd.f32 %v334, 0.9
    %v351 = vadd.f32 %v335, 0.9
    %v352 = vadd.f32 %v336, 0.9
    %v353 = vld [vmem:[#allocation4] sm:$0xff]
    %v354 = vld [vmem:[#allocation4 + $0x8] sm:$0xff]
    %v371 = vcombine.low %v337, %v338
    %v372 = vcombine.low %v339, %v340
    %v373 = vcombine.low %v341, %v342
    %v374 = vcombine.low %v343, %v344
    %v376 = vunpack.c.l.s4 1966171168
    %v377 = vunpack.c.0.s8 %v376
    %v378 = vlaneseq
    %v379 = vshrl.u32 %v378, 7
    %v380 = vsub.s32 %v377, %v379
    %v381 = vrot.slane %v371, %v380
    %v383 = vunpack.c.l.s4 1966171168
    %v384 = vunpack.c.0.s8 %v383
    %v385 = vlaneseq
    %v386 = vshrl.u32 %v385, 7
    %v387 = vsub.s32 %v384, %v386
    %v388 = vrot.slane %v372, %v387
    %v390 = vunpack.c.l.s4 1966171168
    %v391 = vunpack.c.0.s8 %v390
    %v392 = vlaneseq
    %v393 = vshrl.u32 %v392, 7
    %v394 = vsub.s32 %v391, %v393
    %v395 = vrot.slane %v373, %v394
    %v397 = vunpack.c.l.s4 1966171168
    %v398 = vunpack.c.0.s8 %v397
    %v399 = vlaneseq
    %v400 = vshrl.u32 %v399, 7
    %v401 = vsub.s32 %v398, %v400
    %v402 = vrot.slane %v374, %v401
    %v403 = vcombine.low %v381, %v388
    %v404 = vcombine.low %v395, %v402
    %v406 = vunpack.c.l.s4 1966171168
    %v407 = vunpack.c.0.s8 %v406
    %v408 = vlaneseq
    %v409 = vshrl.u32 %v408, 7
    %v410 = vsub.s32 %v407, %v409
    %v411 = vrot.slane %v403, %v410
    %v413 = vunpack.c.l.s4 1966171168
    %v414 = vunpack.c.0.s8 %v413
    %v415 = vlaneseq
    %v416 = vshrl.u32 %v415, 7
    %v417 = vsub.s32 %v414, %v416
    %v418 = vrot.slane %v404, %v417
    %v419 = vcombine.low %v411, %v418
    %v420 = vcombine.low %v345, %v346
    %v421 = vcombine.low %v347, %v348
    %v422 = vcombine.low %v349, %v350
    %v423 = vcombine.low %v351, %v352
    %v425 = vunpack.c.l.s4 1966171168
    %v426 = vunpack.c.0.s8 %v425
    %v427 = vlaneseq
    %v428 = vshrl.u32 %v427, 7
    %v429 = vsub.s32 %v426, %v428
    %v430 = vrot.slane %v420, %v429
    %v432 = vunpack.c.l.s4 1966171168
    %v433 = vunpack.c.0.s8 %v432
    %v434 = vlaneseq
    %v435 = vshrl.u32 %v434, 7
    %v436 = vsub.s32 %v433, %v435
    %v437 = vrot.slane %v421, %v436
    %v439 = vunpack.c.l.s4 1966171168
    %v440 = vunpack.c.0.s8 %v439
    %v441 = vlaneseq
    %v442 = vshrl.u32 %v441, 7
    %v443 = vsub.s32 %v440, %v442
    %v444 = vrot.slane %v422, %v443
    %v446 = vunpack.c.l.s4 1966171168
    %v447 = vunpack.c.0.s8 %v446
    %v448 = vlaneseq
    %v449 = vshrl.u32 %v448, 7
    %v450 = vsub.s32 %v447, %v449
    %v451 = vrot.slane %v423, %v450
    %v452 = vcombine.low %v430, %v437
    %v453 = vcombine.low %v444, %v451
    %v455 = vunpack.c.l.s4 1966171168
    %v456 = vunpack.c.0.s8 %v455
    %v457 = vlaneseq
    %v458 = vshrl.u32 %v457, 7
    %v459 = vsub.s32 %v456, %v458
    %v460 = vrot.slane %v452, %v459
    %v462 = vunpack.c.l.s4 1966171168
    %v463 = vunpack.c.0.s8 %v462
    %v464 = vlaneseq
    %v465 = vshrl.u32 %v464, 7
    %v466 = vsub.s32 %v463, %v465
    %v467 = vrot.slane %v453, %v466
    %v468 = vcombine.low %v460, %v467
    %v471 = vmul.f32 %v353, %v419
    %v472 = vmul.f32 %v354, %v468
    %473 = vst [vmem:[#allocation7] sm:$0xff] %v471
    %474 = vst [vmem:[#allocation7 + $0x8] sm:$0xff] %v472
    // Predicated region
    $region10: #{tpu_custom_call.1} parent=1 // pred_check
      _
    $region11: #{tpu_custom_call.1} parent=1 // pred_check_branch
      %476 = sbr.rel (0) target = $region13
    $region12: #{tpu_custom_call.1} parent=1 // pred_region
      %s478 = ssub.s32 256, 256
      %479 = vsyncadd [#allocation6], %s478
      %s481 = sshll.u32 [#allocation7], 4
      %s482 = int_to_ptr.vmem [resolvable:$true] %s481
      %484 = dma.vmem_to_hbm [thread:$0]  %s482, 256, %s2, [#allocation6]
    $region13: #{tpu_custom_call.1} parent=1 // pred_fallthru
      _
    // Predicated region
    $region14: #{tpu_custom_call.1} parent=1 // pred_check
      _
    $region15: #{tpu_custom_call.1} parent=1 // pred_check_branch
      %486 = sbr.rel (0) target = $region17
    $region16: #{tpu_custom_call.1} parent=1 // pred_region
      %487 = dma.done [#allocation6], 256
    $region17: #{tpu_custom_call.1} parent=1 // pred_fallthru
      _
    %488 = vsyncpa [#allocation5], 1
    %489 = vsyncpa [#allocation6], 1

</llo_original>
